<compile_context>
chip_gen: v7x
topology: tpu7x:2x2x1
jax: 0.10.0
libtpu: 0.0.40
codegen_flags: <defaults>
</compile_context>

<pallas_src>
import functools
import string

import jax
import jax.numpy as jnp
from jax.experimental import pallas as pl
from jax.experimental.pallas import tpu as pltpu

ALL_LETTERS = string.ascii_letters + " .,;'"
N_LETTERS = len(ALL_LETTERS)     # 57
N_HIDDEN = 128
N_CATEGORIES = 18                # typical number of name-language categories

LETTERS_PAD = 128                # pad one-hot dim so the fused K = 128 + 128 = 256
CATS_PAD = 128                   # lane-dense logits / output


def rnn_seq_kernel(x_ref, h0_ref, w_ref, b_ref, wo_ref, bo_ref,
                   out_ref, h_ref, *, n_categories):
    """Fused RNN over the time grid axis.  Per step t (PyTorch semantics):
         h   = tanh([x_t | h] @ [Wi; Wh] + (bi + bh))
         y_t = log_softmax(h @ Wo + bo)
    The hidden state is carried in the resident output block `h_ref`; weights
    stay resident in VMEM across all timesteps.
    """
    t = pl.program_id(0)

    @pl.when(t == 0)
    def _():
        h_ref[...] = h0_ref[...]

    x = x_ref[...]                                   # (B, 128) bf16 (padded one-hot)
    h = h_ref[...]                                   # (B, 128) f32 carry

    # Folded i2h + h2h: one bf16 MXU matmul with K = 256, f32 accumulation.
    xh = jnp.concatenate([x, h.astype(x.dtype)], axis=-1)           # (B, 256) bf16
    pre = jnp.dot(xh, w_ref[...], preferred_element_type=jnp.float32) + b_ref[...]
    h_new = jnp.tanh(pre)                                           # (B, 128) f32

    logits = jnp.dot(h_new.astype(wo_ref.dtype), wo_ref[...],
                     preferred_element_type=jnp.float32) + bo_ref[...]

    # Mask padded category lanes before the softmax reductions.
    col = jax.lax.broadcasted_iota(jnp.int32, logits.shape, 1)
    logits = jnp.where(col < n_categories, logits, -jnp.inf)

    # Numerically stable log-softmax (f32).
    m = jnp.max(logits, axis=-1, keepdims=True)
    s = logits - m
    lse = jnp.log(jnp.sum(jnp.exp(s), axis=-1, keepdims=True))

    out_ref[...] = s - lse
    h_ref[...] = h_new


def rnn_forward_seq(x_seq, h0, params):
    """x_seq: [T, B, N_LETTERS] one-hot f32, h0: [B, N_HIDDEN] f32.
    Returns (log_probs [T, B, N_CATEGORIES], h_final [B, N_HIDDEN])."""
    wi, bi, wh, bh, wo, bo = params
    T, B, _ = x_seq.shape
    H = wh.shape[1]

    # ---- weight / input prep (outside the kernel, cheap, done once per call) ----
    wi_pad = jnp.zeros((LETTERS_PAD, H), jnp.float32).at[:N_LETTERS].set(wi)
    w_comb = jnp.concatenate([wi_pad, wh], axis=0).astype(jnp.bfloat16)   # [256, H]
    b_comb = (bi + bh).astype(jnp.float32)                                 # [1, H]
    wo_pad = jnp.zeros((H, CATS_PAD), jnp.float32).at[:, :N_CATEGORIES].set(wo)
    wo_pad = wo_pad.astype(jnp.bfloat16)                                   # [H, 128]
    bo_pad = jnp.zeros((1, CATS_PAD), jnp.float32).at[:, :N_CATEGORIES].set(bo)

    x_pad = jnp.zeros((T, B, LETTERS_PAD), jnp.float32).at[:, :, :N_LETTERS].set(x_seq)
    x_pad = x_pad.astype(jnp.bfloat16)

    kernel = functools.partial(rnn_seq_kernel, n_categories=N_CATEGORIES)

    out_pad, h_final = pl.pallas_call(
        kernel,
        grid=(T,),
        in_specs=[
            pl.BlockSpec((None, B, LETTERS_PAD), lambda t: (t, 0, 0)),  # x_t
            pl.BlockSpec((B, H), lambda t: (0, 0)),                     # h0
            pl.BlockSpec((LETTERS_PAD + H, H), lambda t: (0, 0)),       # [Wi; Wh]
            pl.BlockSpec((1, H), lambda t: (0, 0)),                     # bi + bh
            pl.BlockSpec((H, CATS_PAD), lambda t: (0, 0)),              # Wo
            pl.BlockSpec((1, CATS_PAD), lambda t: (0, 0)),              # bo
        ],
        out_specs=(
            pl.BlockSpec((None, B, CATS_PAD), lambda t: (t, 0, 0)),     # y_t
            pl.BlockSpec((B, H), lambda t: (0, 0)),                     # resident h carry
        ),
        out_shape=(
            jax.ShapeDtypeStruct((T, B, CATS_PAD), jnp.float32),
            jax.ShapeDtypeStruct((B, H), jnp.float32),
        ),
        compiler_params=pltpu.CompilerParams(
            dimension_semantics=("arbitrary",)),   # sequential carry through h
    )(x_pad, h0, w_comb, b_comb, wo_pad, bo_pad)

    return out_pad[:, :, :N_CATEGORIES], h_final


def init_params(key, input_size, hidden_size, output_size):
    """PyTorch nn.Linear-style init (uniform +-1/sqrt(fan_in)), weights stored [in, out]."""
    ks = jax.random.split(key, 6)

    def lin(kw, kb, fan_in, fan_out):
        bound = 1.0 / (fan_in ** 0.5)
        w = jax.random.uniform(kw, (fan_in, fan_out), jnp.float32, -bound, bound)
        b = jax.random.uniform(kb, (1, fan_out), jnp.float32, -bound, bound)
        return w, b

    wi, bi = lin(ks[0], ks[1], input_size, hidden_size)   # i2h
    wh, bh = lin(ks[2], ks[3], hidden_size, hidden_size)  # h2h
    wo, bo = lin(ks[4], ks[5], hidden_size, output_size)  # h2o
    return (wi, bi, wh, bh, wo, bo)


def rnn_reference(x_seq, h0, params):
    """Pure-JAX reference with matching bf16 operand quantization (f32 math)."""
    wi, bi, wh, bh, wo, bo = params
    q = lambda a: a.astype(jnp.bfloat16).astype(jnp.float32)
    wi_q, wh_q, wo_q = q(wi), q(wh), q(wo)

    def step(h, x):
        h_new = jnp.tanh(q(x) @ wi_q + q(h) @ wh_q + (bi + bh))
        logits = q(h_new) @ wo_q + bo
        return h_new, jax.nn.log_softmax(logits, axis=-1)

    h_final, outs = jax.lax.scan(step, h0, x_seq)
    return outs, h_final


if __name__ == "__main__":
    key = jax.random.PRNGKey(0)
    params = init_params(key, N_LETTERS, N_HIDDEN, N_CATEGORIES)

    # Sequence "Albert" (letterToTensor per step), batch of 8 names to fill MXU sublanes.
    name = "Albert"
    T, B = len(name), 8
    idx = jnp.array([ALL_LETTERS.find(c) for c in name], jnp.int32)
    x_one = jax.nn.one_hot(idx, N_LETTERS, dtype=jnp.float32)          # [T, n_letters]
    x_seq = jnp.broadcast_to(x_one[:, None, :], (T, B, N_LETTERS))
    h0 = jnp.zeros((B, N_HIDDEN), jnp.float32)                         # initHidden()

    fwd = jax.jit(rnn_forward_seq)
    out, h_final = fwd(x_seq, h0, params)
    jax.block_until_ready((out, h_final))

    assert out.shape == (T, B, N_CATEGORIES), out.shape
    assert h_final.shape == (B, N_HIDDEN), h_final.shape

    # log_softmax rows sum to ~1 in prob space
    probs_sum = jnp.sum(jnp.exp(out), axis=-1)
    assert bool(jnp.allclose(probs_sum, 1.0, atol=1e-4)), probs_sum

    # numerics vs pure-JAX reference
    out_ref, h_ref = rnn_reference(x_seq, h0, params)
    assert bool(jnp.allclose(out, out_ref, atol=2e-2, rtol=2e-2))
    assert bool(jnp.allclose(h_final, h_ref, atol=2e-2, rtol=2e-2))

    print("KERNEL_OK")
</pallas_src>

<mosaic_0001>
module attributes {stable_mosaic.version = 11 : i64} {
  func.func @rnn_seq_kernel(%arg0: i32, %arg1: memref<1x8x128xbf16, #tpu.memory_space<vmem>>, %arg2: memref<8x128xf32, #tpu.memory_space<vmem>>, %arg3: memref<256x128xbf16, #tpu.memory_space<vmem>>, %arg4: memref<1x128xf32, #tpu.memory_space<vmem>>, %arg5: memref<128x128xbf16, #tpu.memory_space<vmem>>, %arg6: memref<1x128xf32, #tpu.memory_space<vmem>>, %arg7: memref<1x8x128xf32, #tpu.memory_space<vmem>>, %arg8: memref<8x128xf32, #tpu.memory_space<vmem>>) attributes {dimension_semantics = [#tpu.dimension_semantics<arbitrary>], iteration_bounds = array<i64: 6>, scalar_prefetch = 0 : i64, scratch_operands = 0 : i64, tpu.core_type = #tpu.core_type<tc>, window_params = [{transform_indices = @transform_0, window_bounds = array<i64: 1, 8, 128>}, {pipeline_mode = #tpu.pipeline_mode<synchronous>, transform_indices = @transform_1, window_bounds = array<i64: 8, 128>}, {pipeline_mode = #tpu.pipeline_mode<synchronous>, transform_indices = @transform_2, window_bounds = array<i64: 256, 128>}, {pipeline_mode = #tpu.pipeline_mode<synchronous>, transform_indices = @transform_3, window_bounds = array<i64: 1, 128>}, {pipeline_mode = #tpu.pipeline_mode<synchronous>, transform_indices = @transform_4, window_bounds = array<i64: 128, 128>}, {pipeline_mode = #tpu.pipeline_mode<synchronous>, transform_indices = @transform_5, window_bounds = array<i64: 1, 128>}, {transform_indices = @transform_6, window_bounds = array<i64: 1, 8, 128>}, {pipeline_mode = #tpu.pipeline_mode<synchronous>, transform_indices = @transform_7, window_bounds = array<i64: 8, 128>}]} {
    %c0_i32 = arith.constant 0 : i32
    %0 = arith.cmpi eq, %arg0, %c0_i32 : i32
    %1 = arith.extui %0 : i1 to i32
    %c0_i32_0 = arith.constant 0 : i32
    %2 = arith.cmpi ne, %1, %c0_i32_0 : i32
    scf.if %2 {
      %c0_22 = arith.constant 0 : index
      %c0_23 = arith.constant 0 : index
      %39 = vector.load %arg2[%c0_22, %c0_23] : memref<8x128xf32, #tpu.memory_space<vmem>>, vector<8x128xf32>
      %c0_24 = arith.constant 0 : index
      %c0_25 = arith.constant 0 : index
      %40 = vector.load %arg8[%c0_24, %c0_25] : memref<8x128xf32, #tpu.memory_space<vmem>>, vector<8x128xf32>
      tpu.vector_store %arg8[%c0_24, %c0_25], %39 {strides = array<i32>} : memref<8x128xf32, #tpu.memory_space<vmem>>, vector<8x128xf32>,
    } else {
    }
    %c0 = arith.constant 0 : index
    %c0_1 = arith.constant 0 : index
    %c0_2 = arith.constant 0 : index
    %3 = vector.load %arg1[%c0, %c0_1, %c0_2] : memref<1x8x128xbf16, #tpu.memory_space<vmem>>, vector<1x8x128xbf16>
    %4 = vector.shape_cast %3 : vector<1x8x128xbf16> to vector<8x128xbf16>
    %c0_3 = arith.constant 0 : index
    %c0_4 = arith.constant 0 : index
    %5 = vector.load %arg8[%c0_3, %c0_4] : memref<8x128xf32, #tpu.memory_space<vmem>>, vector<8x128xf32>
    %6 = arith.truncf %5 : vector<8x128xf32> to vector<8x128xbf16>
    %7 = tpu.concatenate %4, %6 in 1 : vector<8x128xbf16>, vector<8x128xbf16> -> vector<8x256xbf16>
    %c0_5 = arith.constant 0 : index
    %c0_6 = arith.constant 0 : index
    %8 = vector.load %arg3[%c0_5, %c0_6] : memref<256x128xbf16, #tpu.memory_space<vmem>>, vector<256x128xbf16>
    %cst = arith.constant dense<0.000000e+00> : vector<8x128xf32>
    %9 = tpu.matmul %7, %8, %cst {dimension_numbers = #tpu.dot_dimension_numbers<[1], [0], [0], [1], [0, 0, 1, 1], [], []>} : vector<8x256xbf16>, vector<256x128xbf16>, vector<8x128xf32> -> vector<8x128xf32>
    %c0_7 = arith.constant 0 : index
    %c0_8 = arith.constant 0 : index
    %10 = vector.load %arg4[%c0_7, %c0_8] : memref<1x128xf32, #tpu.memory_space<vmem>>, vector<1x128xf32>
    %11 = vector.broadcast %10 : vector<1x128xf32> to vector<8x128xf32>
    %12 = arith.addf %9, %11 : vector<8x128xf32>
    %13 = math.tanh %12 : vector<8x128xf32>
    %14 = arith.truncf %13 : vector<8x128xf32> to vector<8x128xbf16>
    %c0_9 = arith.constant 0 : index
    %c0_10 = arith.constant 0 : index
    %15 = vector.load %arg5[%c0_9, %c0_10] : memref<128x128xbf16, #tpu.memory_space<vmem>>, vector<128x128xbf16>
    %cst_11 = arith.constant dense<0.000000e+00> : vector<8x128xf32>
    %16 = tpu.matmul %14, %15, %cst_11 {dimension_numbers = #tpu.dot_dimension_numbers<[1], [0], [0], [1], [0, 0, 1, 1], [], []>} : vector<8x128xbf16>, vector<128x128xbf16>, vector<8x128xf32> -> vector<8x128xf32>
    %c0_12 = arith.constant 0 : index
    %c0_13 = arith.constant 0 : index
    %17 = vector.load %arg6[%c0_12, %c0_13] : memref<1x128xf32, #tpu.memory_space<vmem>>, vector<1x128xf32>
    %18 = vector.broadcast %17 : vector<1x128xf32> to vector<8x128xf32>
    %19 = arith.addf %16, %18 : vector<8x128xf32>
    %20 = tpu.iota {dimensions = array<i32: 1>} : vector<8x128xi32>
    %c18_i32 = arith.constant 18 : i32
    %21 = vector.broadcast %c18_i32 : i32 to vector<8x128xi32>
    %22 = arith.cmpi slt, %20, %21 : vector<8x128xi32>
    %cst_14 = arith.constant 0xFF800000 : f32
    %23 = vector.broadcast %cst_14 : f32 to vector<8x128xf32>
    %24 = arith.select %22, %19, %23 : vector<8x128xi1>, vector<8x128xf32>
    %cst_15 = arith.constant dense<0xFF800000> : vector<8xf32>
    %25 = vector.multi_reduction <maximumf>, %24, %cst_15 [1] : vector<8x128xf32> to vector<8xf32>
    %26 = vector.shape_cast %25 : vector<8xf32> to vector<8x1xf32>
    %27 = vector.broadcast %26 : vector<8x1xf32> to vector<8x128xf32>
    %28 = arith.subf %24, %27 : vector<8x128xf32>
    %29 = math.exp %28 : vector<8x128xf32>
    %cst_16 = arith.constant dense<0.000000e+00> : vector<8xf32>
    %30 = vector.multi_reduction <add>, %29, %cst_16 [1] : vector<8x128xf32> to vector<8xf32>
    %31 = vector.shape_cast %30 : vector<8xf32> to vector<8x1xf32>
    %32 = math.log %31 : vector<8x1xf32>
    %33 = vector.broadcast %32 : vector<8x1xf32> to vector<8x128xf32>
    %34 = arith.subf %28, %33 : vector<8x128xf32>
    %c0_17 = arith.constant 0 : index
    %c0_18 = arith.constant 0 : index
    %c0_19 = arith.constant 0 : index
    %35 = vector.load %arg7[%c0_17, %c0_18, %c0_19] : memref<1x8x128xf32, #tpu.memory_space<vmem>>, vector<1x8x128xf32>
    %36 = vector.shape_cast %35 : vector<1x8x128xf32> to vector<8x128xf32>
    %37 = vector.shape_cast %34 : vector<8x128xf32> to vector<1x8x128xf32>
    tpu.vector_store %arg7[%c0_17, %c0_18, %c0_19], %37 {strides = array<i32>} : memref<1x8x128xf32, #tpu.memory_space<vmem>>, vector<1x8x128xf32>,
    %c0_20 = arith.constant 0 : index
    %c0_21 = arith.constant 0 : index
    %38 = vector.load %arg8[%c0_20, %c0_21] : memref<8x128xf32, #tpu.memory_space<vmem>>, vector<8x128xf32>
    tpu.vector_store %arg8[%c0_20, %c0_21], %13 {strides = array<i32>} : memref<8x128xf32, #tpu.memory_space<vmem>>, vector<8x128xf32>,
    return
  }
  func.func @transform_0(%arg0: i32) -> (i32, i32, i32) {
    %c0_i32 = arith.constant 0 : i32
    %c0_i32_0 = arith.constant 0 : i32
    %c0_i32_1 = arith.constant 0 : i32
    return %arg0, %c0_i32, %c0_i32_0 : i32, i32, i32
  }
  func.func @transform_1(%arg0: i32) -> (i32, i32) {
    %c0_i32 = arith.constant 0 : i32
    %c0_i32_0 = arith.constant 0 : i32
    %c0_i32_1 = arith.constant 0 : i32
    return %c0_i32, %c0_i32_0 : i32, i32
  }
  func.func @transform_2(%arg0: i32) -> (i32, i32) {
    %c0_i32 = arith.constant 0 : i32
    %c0_i32_0 = arith.constant 0 : i32
    %c0_i32_1 = arith.constant 0 : i32
    return %c0_i32, %c0_i32_0 : i32, i32
  }
  func.func @transform_3(%arg0: i32) -> (i32, i32) {
    %c0_i32 = arith.constant 0 : i32
    %c0_i32_0 = arith.constant 0 : i32
    %c0_i32_1 = arith.constant 0 : i32
    return %c0_i32, %c0_i32_0 : i32, i32
  }
  func.func @transform_4(%arg0: i32) -> (i32, i32) {
    %c0_i32 = arith.constant 0 : i32
    %c0_i32_0 = arith.constant 0 : i32
    %c0_i32_1 = arith.constant 0 : i32
    return %c0_i32, %c0_i32_0 : i32, i32
  }
  func.func @transform_5(%arg0: i32) -> (i32, i32) {
    %c0_i32 = arith.constant 0 : i32
    %c0_i32_0 = arith.constant 0 : i32
    %c0_i32_1 = arith.constant 0 : i32
    return %c0_i32, %c0_i32_0 : i32, i32
  }
  func.func @transform_6(%arg0: i32) -> (i32, i32, i32) {
    %c0_i32 = arith.constant 0 : i32
    %c0_i32_0 = arith.constant 0 : i32
    %c0_i32_1 = arith.constant 0 : i32
    return %arg0, %c0_i32, %c0_i32_0 : i32, i32, i32
  }
  func.func @transform_7(%arg0: i32) -> (i32, i32) {
    %c0_i32 = arith.constant 0 : i32
    %c0_i32_0 = arith.constant 0 : i32
    %c0_i32_1 = arith.constant 0 : i32
    return %c0_i32, %c0_i32_0 : i32, i32
  }
}

</mosaic_0001>

<llo_original>
// kernel: rnn_forward_seq.1
$region0: #{rnn_forward_seq.1}
  #allocation0 [shape = 'u32[]', space=smem, size = 0x4, offset = 0x4, fixed_abs, tag = 'smem constant byte address 0x4 - core index']
  #allocation1 [shape = 'u32[144,128]{1,0:T(1,128)}', space=vmem, size = 0x12000, scoped, tag = 'internal scratch']
  %s0 = inlined_call_operand.vmem [shape: bf16[6,8,128], index: 0, kind: input, shape index: {}]
  %s1 = inlined_call_operand.vmem [shape: f32[8,128], index: 1, kind: input, shape index: {}]
  %s2 = inlined_call_operand.vmem [shape: bf16[256,128], index: 2, kind: input, shape index: {}]
  %s3 = inlined_call_operand.vmem [shape: f32[1,128], index: 3, kind: input, shape index: {}]
  %s4 = inlined_call_operand.vmem [shape: bf16[128,128], index: 4, kind: input, shape index: {}]
  %s5 = inlined_call_operand.vmem [shape: f32[1,128], index: 5, kind: input, shape index: {}]
  %s6 = inlined_call_operand.hbm [shape: f32[6,8,128], index: 6, kind: output, shape index: {0}]
  %s7 = inlined_call_operand.hbm [shape: f32[8,128], index: 7, kind: output, shape index: {1}]
  %8 = xla_tuple %s6, %s7
  %s9 = sld [smem:[#allocation0]]
  $region69: #{rnn_forward_seq.1} parent=0
    _
  %s11 = ssub.s32 1, %s9
  %s12 = scalar_select 0, %s11, %s9
  $region1: #{rnn_forward_seq.1} parent=0
    #allocation2 [shape = 'u8[8192]{0}', space=vmem, size = 0x2000, scoped, tag = 'output window, operand 0']
    #allocation3 [shape = 's32[2]{0}', space=sflag, size = 0x8, scoped, tag = 'scoped memory for rnn_forward_seq.1']
    #allocation4 [shape = 'u8[4096]{0}', space=vmem, size = 0x1000, scoped, tag = 'output window, operand 1, single buffered']
    #allocation5 [shape = 's32[1]{0}', space=sflag, size = 0x4, scoped, tag = 'scoped memory for rnn_forward_seq.1']
    %13 = vsyncpa [#allocation3], 0
    %s14 = scalar_lea.sflag [#allocation3], 1
    %15 = vsyncpa %s14, 0
    %16 = vsyncpa [#allocation5], 0
    loop: start=0, step=1, limit=8
    $region2: #{rnn_forward_seq.1} parent=1 // loop_pre_header
      _
    $region3: #{rnn_forward_seq.1} parent=1 // loop_header
      %s18 = sphi 0, %s22
      %p19 = scmp.ge.s32.totalorder %s18, 8
      %s28 = sphi 0, %s30
      %s31 = sphi 0, %s28
      %s32 = sphi 0, %s31
      %s48 = sphi 0, %s32
      %s52 = sphi 0, %s52
      %s54 = sphi 0, %s52
      %s55 = sphi 0, %s54
      %s69 = sphi 0, %s55
      %s73 = sphi 0, %s73
      %s75 = sphi 0, %s73
      %s76 = sphi 0, %s75
      %s90 = sphi 0, %s76
      %s94 = sphi 0, %s94
      %s96 = sphi 0, %s94
      %s97 = sphi 0, %s96
      %s111 = sphi 0, %s97
      %s115 = sphi 0, %s115
      %s117 = sphi 0, %s115
      %s118 = sphi 0, %s117
      %s132 = sphi 0, %s118
      %s136 = sphi 0, %s136
      %s138 = sphi 0, %s136
      %s139 = sphi 0, %s138
      %s153 = sphi 0, %s139
      %s159 = sphi 0, %s161
      %s162 = sphi 0, %s159
      %s163 = sphi 0, %s162
      %s179 = sphi 0, %s163
      %s183 = sphi 0, %s183
      %s185 = sphi 0, %s183
      %s186 = sphi 0, %s185
      %s200 = sphi 0, %s186
    $region4: #{rnn_forward_seq.1} parent=1 // loop_header_branch
      %21 = sbr.rel (%p19) target = $region8
    $region5: #{rnn_forward_seq.1} parent=1 // loop_body
      %s23 = ssub.s32 %s18, 1
      %s24 = ssub.s32 %s18, 2
      %s25 = sadd.s32 %s18, 1
      %s26 = ssub.s32 %s18, %s25
      %p27 = scmp.eq.s32.totalorder %s26, 0
      %s29 = sadd.s32 %s28, 1
      %s30 = scalar_select %p27, %s28, %s29
      %p33 = pneg %p27
      %p34 = scmp.eq.s32.totalorder %s18, 5
      %p35 = por %p33, %p34
      %p36 = scmp.ne.s32.totalorder %s28, %s31
      %p37 = scmp.eq.s32.totalorder %s18, 0
      %p38 = por %p36, %p37
      %p39 = scmp.ne.s32.totalorder %s28, %s31
      %p40 = scmp.eq.s32.totalorder %s23, 5
      %p41 = por %p39, %p40
      %p42 = scmp.ne.s32.totalorder %s31, %s32
      %p43 = scmp.eq.s32.totalorder %s23, 0
      %p44 = por %p42, %p43
      %p45 = scmp.ne.s32.totalorder %s31, %s32
      %p46 = scmp.eq.s32.totalorder %s24, 5
      %p47 = por %p45, %p46
      %p49 = scmp.ne.s32.totalorder %s32, %s48
      %p50 = scmp.eq.s32.totalorder %s24, 0
      %p51 = por %p49, %p50
      %s53 = sadd.s32 %s52, 1
      %p56 = scmp.eq.s32.totalorder %s18, 5
      %p57 = scmp.ne.s32.totalorder %s52, %s54
      %p58 = scmp.eq.s32.totalorder %s18, 0
      %p59 = por %p57, %p58
      %p60 = scmp.ne.s32.totalorder %s52, %s54
      %p61 = scmp.eq.s32.totalorder %s23, 5
      %p62 = por %p60, %p61
      %p63 = scmp.ne.s32.totalorder %s54, %s55
      %p64 = scmp.eq.s32.totalorder %s23, 0
      %p65 = por %p63, %p64
      %p66 = scmp.ne.s32.totalorder %s54, %s55
      %p67 = scmp.eq.s32.totalorder %s24, 5
      %p68 = por %p66, %p67
      %p70 = scmp.ne.s32.totalorder %s55, %s69
      %p71 = scmp.eq.s32.totalorder %s24, 0
      %p72 = por %p70, %p71
      %s74 = sadd.s32 %s73, 1
      %p77 = scmp.eq.s32.totalorder %s18, 5
      %p78 = scmp.ne.s32.totalorder %s73, %s75
      %p79 = scmp.eq.s32.totalorder %s18, 0
      %p80 = por %p78, %p79
      %p81 = scmp.ne.s32.totalorder %s73, %s75
      %p82 = scmp.eq.s32.totalorder %s23, 5
      %p83 = por %p81, %p82
      %p84 = scmp.ne.s32.totalorder %s75, %s76
      %p85 = scmp.eq.s32.totalorder %s23, 0
      %p86 = por %p84, %p85
      %p87 = scmp.ne.s32.totalorder %s75, %s76
      %p88 = scmp.eq.s32.totalorder %s24, 5
      %p89 = por %p87, %p88
      %p91 = scmp.ne.s32.totalorder %s76, %s90
      %p92 = scmp.eq.s32.totalorder %s24, 0
      %p93 = por %p91, %p92
      %s95 = sadd.s32 %s94, 1
      %p98 = scmp.eq.s32.totalorder %s18, 5
      %p99 = scmp.ne.s32.totalorder %s94, %s96
      %p100 = scmp.eq.s32.totalorder %s18, 0
      %p101 = por %p99, %p100
      %p102 = scmp.ne.s32.totalorder %s94, %s96
      %p103 = scmp.eq.s32.totalorder %s23, 5
      %p104 = por %p102, %p103
      %p105 = scmp.ne.s32.totalorder %s96, %s97
      %p106 = scmp.eq.s32.totalorder %s23, 0
      %p107 = por %p105, %p106
      %p108 = scmp.ne.s32.totalorder %s96, %s97
      %p109 = scmp.eq.s32.totalorder %s24, 5
      %p110 = por %p108, %p109
      %p112 = scmp.ne.s32.totalorder %s97, %s111
      %p113 = scmp.eq.s32.totalorder %s24, 0
      %p114 = por %p112, %p113
      %s116 = sadd.s32 %s115, 1
      %p119 = scmp.eq.s32.totalorder %s18, 5
      %p120 = scmp.ne.s32.totalorder %s115, %s117
      %p121 = scmp.eq.s32.totalorder %s18, 0
      %p122 = por %p120, %p121
      %p123 = scmp.ne.s32.totalorder %s115, %s117
      %p124 = scmp.eq.s32.totalorder %s23, 5
      %p125 = por %p123, %p124
      %p126 = scmp.ne.s32.totalorder %s117, %s118
      %p127 = scmp.eq.s32.totalorder %s23, 0
      %p128 = por %p126, %p127
      %p129 = scmp.ne.s32.totalorder %s117, %s118
      %p130 = scmp.eq.s32.totalorder %s24, 5
      %p131 = por %p129, %p130
      %p133 = scmp.ne.s32.totalorder %s118, %s132
      %p134 = scmp.eq.s32.totalorder %s24, 0
      %p135 = por %p133, %p134
      %s137 = sadd.s32 %s136, 1
      %p140 = scmp.eq.s32.totalorder %s18, 5
      %p141 = scmp.ne.s32.totalorder %s136, %s138
      %p142 = scmp.eq.s32.totalorder %s18, 0
      %p143 = por %p141, %p142
      %p144 = scmp.ne.s32.totalorder %s136, %s138
      %p145 = scmp.eq.s32.totalorder %s23, 5
      %p146 = por %p144, %p145
      %p147 = scmp.ne.s32.totalorder %s138, %s139
      %p148 = scmp.eq.s32.totalorder %s23, 0
      %p149 = por %p147, %p148
      %p150 = scmp.ne.s32.totalorder %s138, %s139
      %p151 = scmp.eq.s32.totalorder %s24, 5
      %p152 = por %p150, %p151
      %p154 = scmp.ne.s32.totalorder %s139, %s153
      %p155 = scmp.eq.s32.totalorder %s24, 0
      %p156 = por %p154, %p155
      %s157 = ssub.s32 %s18, %s25
      %p158 = scmp.eq.s32.totalorder %s157, 0
      %s160 = sadd.s32 %s159, 1
      %s161 = scalar_select %p158, %s159, %s160
      %p164 = pneg %p158
      %p165 = scmp.eq.s32.totalorder %s18, 5
      %p166 = por %p164, %p165
      %p167 = scmp.ne.s32.totalorder %s159, %s162
      %p168 = scmp.eq.s32.totalorder %s18, 0
      %p169 = por %p167, %p168
      %p170 = scmp.ne.s32.totalorder %s159, %s162
      %p171 = scmp.eq.s32.totalorder %s23, 5
      %p172 = por %p170, %p171
      %p173 = scmp.ne.s32.totalorder %s162, %s163
      %p174 = scmp.eq.s32.totalorder %s23, 0
      %p175 = por %p173, %p174
      %p176 = scmp.ne.s32.totalorder %s162, %s163
      %p177 = scmp.eq.s32.totalorder %s24, 5
      %p178 = por %p176, %p177
      %p180 = scmp.ne.s32.totalorder %s163, %s179
      %p181 = scmp.eq.s32.totalorder %s24, 0
      %p182 = por %p180, %p181
      %s184 = sadd.s32 %s183, 1
      %p187 = scmp.eq.s32.totalorder %s18, 5
      %p188 = scmp.ne.s32.totalorder %s183, %s185
      %p189 = scmp.eq.s32.totalorder %s18, 0
      %p190 = por %p188, %p189
      %p191 = scmp.ne.s32.totalorder %s183, %s185
      %p192 = scmp.eq.s32.totalorder %s23, 5
      %p193 = por %p191, %p192
      %p194 = scmp.ne.s32.totalorder %s185, %s186
      %p195 = scmp.eq.s32.totalorder %s23, 0
      %p196 = por %p194, %p195
      %p197 = scmp.ne.s32.totalorder %s185, %s186
      %p198 = scmp.eq.s32.totalorder %s24, 5
      %p199 = por %p197, %p198
      %p201 = scmp.ne.s32.totalorder %s186, %s200
      %p202 = scmp.eq.s32.totalorder %s24, 0
      %p203 = por %p201, %p202
      %p204 = scmp.le.s32.totalorder 1, %s18
      %p205 = scmp.lt.s32.totalorder %s18, 7
      %p206 = pnand %p204, %p205
      %p207 = pneg %p206
      // Predicated region
      $region9: #{rnn_forward_seq.1} parent=5 // pred_check
        _
      $region10: #{rnn_forward_seq.1} parent=5 // pred_check_branch
        %209 = sbr.rel (%p206) target = $region12
      $region11: #{rnn_forward_seq.1} parent=5 // pred_region
        %s210 = ssub.s32 %s18, 1
        // Predicated region
        $region13: #{rnn_forward_seq.1} parent=11 // pred_check
          %p211 = pneg %p65
        $region14: #{rnn_forward_seq.1} parent=11 // pred_check_branch
          %213 = sbr.rel (%p211) target = $region16
        $region15: #{rnn_forward_seq.1} parent=11 // pred_region
          _
        $region16: #{rnn_forward_seq.1} parent=11 // pred_fallthru
          _
        // Predicated region
        $region17: #{rnn_forward_seq.1} parent=11 // pred_check
          %p214 = pneg %p86
        $region18: #{rnn_forward_seq.1} parent=11 // pred_check_branch
          %216 = sbr.rel (%p214) target = $region20
        $region19: #{rnn_forward_seq.1} parent=11 // pred_region
          _
        $region20: #{rnn_forward_seq.1} parent=11 // pred_fallthru
          _
        // Predicated region
        $region21: #{rnn_forward_seq.1} parent=11 // pred_check
          %p217 = pneg %p107
        $region22: #{rnn_forward_seq.1} parent=11 // pred_check_branch
          %219 = sbr.rel (%p217) target = $region24
        $region23: #{rnn_forward_seq.1} parent=11 // pred_region
          _
        $region24: #{rnn_forward_seq.1} parent=11 // pred_fallthru
          _
        // Predicated region
        $region25: #{rnn_forward_seq.1} parent=11 // pred_check
          %p220 = pneg %p128
        $region26: #{rnn_forward_seq.1} parent=11 // pred_check_branch
          %222 = sbr.rel (%p220) target = $region28
        $region27: #{rnn_forward_seq.1} parent=11 // pred_region
          _
        $region28: #{rnn_forward_seq.1} parent=11 // pred_fallthru
          _
        // Predicated region
        $region29: #{rnn_forward_seq.1} parent=11 // pred_check
          %p223 = pneg %p149
        $region30: #{rnn_forward_seq.1} parent=11 // pred_check_branch
          %225 = sbr.rel (%p223) target = $region32
        $region31: #{rnn_forward_seq.1} parent=11 // pred_region
          _
        $region32: #{rnn_forward_seq.1} parent=11 // pred_fallthru
          _
      $region12: #{rnn_forward_seq.1} parent=5 // pred_fallthru
        _
      %p226 = scmp.lt.s32.totalorder %s18, 6
      // Predicated region
      $region33: #{rnn_forward_seq.1} parent=5 // pred_check
        %p227 = pneg %p226
      $region34: #{rnn_forward_seq.1} parent=5 // pred_check_branch
        %229 = sbr.rel (%p227) target = $region36
      $region35: #{rnn_forward_seq.1} parent=5 // pred_region
        // Predicated region
        $region37: #{rnn_forward_seq.1} parent=35 // pred_check
          %p230 = pneg %p38
        $region38: #{rnn_forward_seq.1} parent=35 // pred_check_branch
          %232 = sbr.rel (%p230) target = $region40
        $region39: #{rnn_forward_seq.1} parent=35 // pred_region
          %p233 = scmp.lt.s32.totalorder %s18, 5
          %s234 = scalar_select %p233, %s18, 5
          %s235 = smul.addr %s234, 4
          %s236 = scalar_lea.vmem %s0, %s235
        $region40: #{rnn_forward_seq.1} parent=35 // pred_fallthru
          _
      $region36: #{rnn_forward_seq.1} parent=5 // pred_fallthru
        _
      %p237 = scmp.le.s32.totalorder 1, %s18
      %p238 = scmp.lt.s32.totalorder %s18, 7
      %p239 = pnand %p237, %p238
      %p240 = pneg %p239
      // Predicated region
      $region41: #{rnn_forward_seq.1} parent=5 // pred_check
        _
      $region42: #{rnn_forward_seq.1} parent=5 // pred_check_branch
        %242 = sbr.rel (%p239) target = $region44
      $region43: #{rnn_forward_seq.1} parent=5 // pred_region
        %s243 = ssub.s32 %s18, 1
        %p244 = scmp.lt.s32.totalorder %s23, 5
        %s245 = scalar_select %p244, %s23, 5
        %s246 = smul.addr %s245, 4
        %s247 = scalar_lea.vmem %s0, %s246
        %p248 = pneg %p44
        %p249 = pneg %p41
        %p250 = pneg %p65
        %p251 = pneg %p62
        %p252 = pneg %p86
        %p253 = pneg %p83
        %p254 = pneg %p107
        %p255 = pneg %p104
        %p256 = pneg %p128
        %p257 = pneg %p125
        %p258 = pneg %p149
        %p259 = pneg %p146
        %p260 = pneg %p175
        %p261 = pneg %p172
        %s262 = sand.u32 %s162, 1
        %s263 = scalar_lea.sflag [#allocation3], %s262
        %s264 = sand.u32 %s162, 1
        %s265 = smul.addr %s264, 8
        %s266 = scalar_lea.vmem [#allocation2], %s265
        %p267 = pneg %p196
        %p268 = pneg %p193
        %p269 = scmp.lt.s32.totalorder %s23, 5
        %s270 = scalar_select %p269, %s23, 5
        %s271 = smul.addr %s270, 4
        %s272 = scalar_lea.vmem %s0, %s271
        %p274 = scmp.eq.s32.totalorder %s23, 0
        // Predicated region
        $region45: #{rnn_forward_seq.1} parent=43 // pred_check
          %p275 = pneg %p274
        $region46: #{rnn_forward_seq.1} parent=43 // pred_check_branch
          %277 = sbr.rel (%p275) target = $region48
        $region47: #{rnn_forward_seq.1} parent=43 // pred_region
          %v278 = vld [vmem:[%s1] sm:$0xff]
          %279 = vst [vmem:[#allocation4] sm:$0xff] %v278
        $region48: #{rnn_forward_seq.1} parent=43 // pred_fallthru
          _
        %v280 = vld [vmem:[%s272] sm:$0xf]
        %v281 = vld [vmem:[#allocation4] sm:$0xff]
        %v282 = vpack.c.bf16 %v281, %v281
        %v283 = vld [vmem:[%s2] sm:$0xf]
        %v284 = vld [vmem:[%s2 + $0x4] sm:$0xf]
        %v285 = vld [vmem:[%s2 + $0x8] sm:$0xf]
        %v286 = vld [vmem:[%s2 + $0xc] sm:$0xf]
        %v287 = vld [vmem:[%s2 + $0x10] sm:$0xf]
        %v288 = vld [vmem:[%s2 + $0x14] sm:$0xf]
        %v289 = vld [vmem:[%s2 + $0x18] sm:$0xf]
        %v290 = vld [vmem:[%s2 + $0x1c] sm:$0xf]
        %v291 = vld [vmem:[%s2 + $0x20] sm:$0xf]
        %v292 = vld [vmem:[%s2 + $0x24] sm:$0xf]
        %v293 = vld [vmem:[%s2 + $0x28] sm:$0xf]
        %v294 = vld [vmem:[%s2 + $0x2c] sm:$0xf]
        %v295 = vld [vmem:[%s2 + $0x30] sm:$0xf]
        %v296 = vld [vmem:[%s2 + $0x34] sm:$0xf]
        %v297 = vld [vmem:[%s2 + $0x38] sm:$0xf]
        %v298 = vld [vmem:[%s2 + $0x3c] sm:$0xf]
        %v299 = vld [vmem:[%s2 + $0x40] sm:$0xf]
        %v300 = vld [vmem:[%s2 + $0x44] sm:$0xf]
        %v301 = vld [vmem:[%s2 + $0x48] sm:$0xf]
        %v302 = vld [vmem:[%s2 + $0x4c] sm:$0xf]
        %v303 = vld [vmem:[%s2 + $0x50] sm:$0xf]
        %v304 = vld [vmem:[%s2 + $0x54] sm:$0xf]
        %v305 = vld [vmem:[%s2 + $0x58] sm:$0xf]
        %v306 = vld [vmem:[%s2 + $0x5c] sm:$0xf]
        %v307 = vld [vmem:[%s2 + $0x60] sm:$0xf]
        %v308 = vld [vmem:[%s2 + $0x64] sm:$0xf]
        %v309 = vld [vmem:[%s2 + $0x68] sm:$0xf]
        %v310 = vld [vmem:[%s2 + $0x6c] sm:$0xf]
        %v311 = vld [vmem:[%s2 + $0x70] sm:$0xf]
        %v312 = vld [vmem:[%s2 + $0x74] sm:$0xf]
        %v313 = vld [vmem:[%s2 + $0x78] sm:$0xf]
        %v314 = vld [vmem:[%s2 + $0x7c] sm:$0xf]
        %v315 = vld [vmem:[%s3] sm:$0x1]
        %v317 = vlaneseq
        %v318 = vshrl.u32 %v317, 7
        %v319 = vsub.s32 0, %v318
        %v320 = vrot.slane %v315, %v319
        %v354 = vunpack.c.l.b16 %v283
        %v355 = vunpack.c.l.b16 %v284
        %v356 = vunpack.c.l.b16 %v285
        %v357 = vunpack.c.l.b16 %v286
        %v358 = vunpack.c.l.b16 %v287
        %v359 = vunpack.c.l.b16 %v288
        %v360 = vunpack.c.l.b16 %v289
        %v361 = vunpack.c.l.b16 %v290
        %v362 = vunpack.c.l.b16 %v291
        %v363 = vunpack.c.l.b16 %v292
        %v364 = vunpack.c.l.b16 %v293
        %v365 = vunpack.c.l.b16 %v294
        %v366 = vunpack.c.l.b16 %v295
        %v367 = vunpack.c.l.b16 %v296
        %v368 = vunpack.c.l.b16 %v297
        %v369 = vunpack.c.l.b16 %v298
        %v370 = vunpack.c.l.b16 %v299
        %v371 = vunpack.c.l.b16 %v300
        %v372 = vunpack.c.l.b16 %v301
        %v373 = vunpack.c.l.b16 %v302
        %v374 = vunpack.c.l.b16 %v303
        %v375 = vunpack.c.l.b16 %v304
        %v376 = vunpack.c.l.b16 %v305
        %v377 = vunpack.c.l.b16 %v306
        %v378 = vunpack.c.l.b16 %v307
        %v379 = vunpack.c.l.b16 %v308
        %v380 = vunpack.c.l.b16 %v309
        %v381 = vunpack.c.l.b16 %v310
        %v382 = vunpack.c.l.b16 %v311
        %v383 = vunpack.c.l.b16 %v312
        %v384 = vunpack.c.l.b16 %v313
        %v385 = vunpack.c.l.b16 %v314
        %v386 = vpack.c.b16 %v355, %v354
        %v387 = vpack.c.b16 %v357, %v356
        %v388 = vpack.c.b16 %v359, %v358
        %v389 = vpack.c.b16 %v361, %v360
        %v390 = vpack.c.b16 %v363, %v362
        %v391 = vpack.c.b16 %v365, %v364
        %v392 = vpack.c.b16 %v367, %v366
        %v393 = vpack.c.b16 %v369, %v368
        %v394 = vpack.c.b16 %v371, %v370
        %v395 = vpack.c.b16 %v373, %v372
        %v396 = vpack.c.b16 %v375, %v374
        %v397 = vpack.c.b16 %v377, %v376
        %v398 = vpack.c.b16 %v379, %v378
        %v399 = vpack.c.b16 %v381, %v380
        %v400 = vpack.c.b16 %v383, %v382
        %v401 = vpack.c.b16 %v385, %v384
        %418 = vmatprep.subr.bf16.mxu0 0
        %419 = vmatpush1.bf16.msra.mxu0 %v386
        %420 = vmatprep.subr.bf16.mxu0 0
        %421 = vmatpush1.bf16.msra.mxu0 %v387
        %422 = vmatprep.subr.bf16.mxu0 0
        %423 = vmatpush1.bf16.msra.mxu0 %v388
        %424 = vmatprep.subr.bf16.mxu0 0
        %425 = vmatpush1.bf16.msra.mxu0 %v389
        %426 = vmatprep.subr.bf16.mxu0 0
        %427 = vmatpush1.bf16.msra.mxu0 %v390
        %428 = vmatprep.subr.bf16.mxu0 0
        %429 = vmatpush1.bf16.msra.mxu0 %v391
        %430 = vmatprep.subr.bf16.mxu0 0
        %431 = vmatpush1.bf16.msra.mxu0 %v392
        %432 = vmatprep.subr.bf16.mxu0 0
        %433 = vmatpush1.bf16.msra.mxu0 %v393
        %434 = vmatprep.subr.bf16.mxu0 0
        %435 = vmatpush1.bf16.msra.mxu0 %v394
        %436 = vmatprep.subr.bf16.mxu0 0
        %437 = vmatpush1.bf16.msra.mxu0 %v395
        %438 = vmatprep.subr.bf16.mxu0 0
        %439 = vmatpush1.bf16.msra.mxu0 %v396
        %440 = vmatprep.subr.bf16.mxu0 0
        %441 = vmatpush1.bf16.msra.mxu0 %v397
        %442 = vmatprep.subr.bf16.mxu0 0
        %443 = vmatpush1.bf16.msra.mxu0 %v398
        %444 = vmatprep.subr.bf16.mxu0 0
        %445 = vmatpush1.bf16.msra.mxu0 %v399
        %446 = vmatprep.subr.bf16.mxu0 0
        %447 = vmatpush1.bf16.msra.mxu0 %v400
        %448 = vmatprep.subr.bf16.mxu0 0
        %449 = vmatpush1.bf16.msra.mxu0 %v401
        %450 = vmatprep.mubr.bf16.mxu0 %v282
        %451 = vmatmul.mubr.bf16.gmra.mrb[0].mxu0 %v280
        %v452 = vpop.f32.mrb[0].mxu0
        %v453 = vadd.f32 %v320, %v452
        %v454 = vpop.f32.mrb[0].mxu0
        %v455 = vpop.f32.mrb[0].mxu0
        %v456 = vpop.f32.mrb[0].mxu0
        %457 = vdwg.mxu0
        %v458 = vtanh.pop %v453
        %v459 = vpack.c.bf16 %v458, %v458
        %v460 = vld [vmem:[%s4] sm:$0xf]
        %v461 = vld [vmem:[%s4 + $0x4] sm:$0xf]
        %v462 = vld [vmem:[%s4 + $0x8] sm:$0xf]
        %v463 = vld [vmem:[%s4 + $0xc] sm:$0xf]
        %v464 = vld [vmem:[%s4 + $0x10] sm:$0xf]
        %v465 = vld [vmem:[%s4 + $0x14] sm:$0xf]
        %v466 = vld [vmem:[%s4 + $0x18] sm:$0xf]
        %v467 = vld [vmem:[%s4 + $0x1c] sm:$0xf]
        %v468 = vld [vmem:[%s4 + $0x20] sm:$0xf]
        %v469 = vld [vmem:[%s4 + $0x24] sm:$0xf]
        %v470 = vld [vmem:[%s4 + $0x28] sm:$0xf]
        %v471 = vld [vmem:[%s4 + $0x2c] sm:$0xf]
        %v472 = vld [vmem:[%s4 + $0x30] sm:$0xf]
        %v473 = vld [vmem:[%s4 + $0x34] sm:$0xf]
        %v474 = vld [vmem:[%s4 + $0x38] sm:$0xf]
        %v475 = vld [vmem:[%s4 + $0x3c] sm:$0xf]
        %v476 = vld [vmem:[%s5] sm:$0x1]
        %v478 = vlaneseq
        %v479 = vshrl.u32 %v478, 7
        %v480 = vsub.s32 0, %v479
        %v481 = vrot.slane %v476, %v480
        %v499 = vunpack.c.l.b16 %v460
        %v500 = vunpack.c.l.b16 %v461
        %v501 = vunpack.c.l.b16 %v462
        %v502 = vunpack.c.l.b16 %v463
        %v503 = vunpack.c.l.b16 %v464
        %v504 = vunpack.c.l.b16 %v465
        %v505 = vunpack.c.l.b16 %v466
        %v506 = vunpack.c.l.b16 %v467
        %v507 = vunpack.c.l.b16 %v468
        %v508 = vunpack.c.l.b16 %v469
        %v509 = vunpack.c.l.b16 %v470
        %v510 = vunpack.c.l.b16 %v471
        %v511 = vunpack.c.l.b16 %v472
        %v512 = vunpack.c.l.b16 %v473
        %v513 = vunpack.c.l.b16 %v474
        %v514 = vunpack.c.l.b16 %v475
        %v515 = vpack.c.b16 %v500, %v499
        %v516 = vpack.c.b16 %v502, %v501
        %v517 = vpack.c.b16 %v504, %v503
        %v518 = vpack.c.b16 %v506, %v505
        %v519 = vpack.c.b16 %v508, %v507
        %v520 = vpack.c.b16 %v510, %v509
        %v521 = vpack.c.b16 %v512, %v511
        %v522 = vpack.c.b16 %v514, %v513
        %531 = vmatprep.subr.bf16.mxu0 0
        %532 = vmatpush1.bf16.msra.mxu0 %v515
        %533 = vmatprep.subr.bf16.mxu0 0
        %534 = vmatpush1.bf16.msra.mxu0 %v516
        %535 = vmatprep.subr.bf16.mxu0 0
        %536 = vmatpush1.bf16.msra.mxu0 %v517
        %537 = vmatprep.subr.bf16.mxu0 0
        %538 = vmatpush1.bf16.msra.mxu0 %v518
        %539 = vmatprep.subr.bf16.mxu0 0
        %540 = vmatpush1.bf16.msra.mxu0 %v519
        %541 = vmatprep.subr.bf16.mxu0 0
        %542 = vmatpush1.bf16.msra.mxu0 %v520
        %543 = vmatprep.subr.bf16.mxu0 0
        %544 = vmatpush1.bf16.msra.mxu0 %v521
        %545 = vmatprep.subr.bf16.mxu0 0
        %546 = vmatpush1.bf16.msra.mxu0 %v522
        %547 = vmatprep.subr.bf16.mxu0 0
        %548 = vmatpush1.bf16.msra.mxu0 0
        %549 = vmatprep.subr.bf16.mxu0 0
        %550 = vmatpush1.bf16.msra.mxu0 0
        %551 = vmatprep.subr.bf16.mxu0 0
        %552 = vmatpush1.bf16.msra.mxu0 0
        %553 = vmatprep.subr.bf16.mxu0 0
        %554 = vmatpush1.bf16.msra.mxu0 0
        %555 = vmatprep.subr.bf16.mxu0 0
        %556 = vmatpush1.bf16.msra.mxu0 0
        %557 = vmatprep.subr.bf16.mxu0 0
        %558 = vmatpush1.bf16.msra.mxu0 0
        %559 = vmatprep.subr.bf16.mxu0 0
        %560 = vmatpush1.bf16.msra.mxu0 0
        %561 = vmatprep.subr.bf16.mxu0 0
        %562 = vmatpush1.bf16.msra.mxu0 0
        %563 = vmatprep.mubr.bf16.mxu0 0
        %564 = vmatmul.mubr.bf16.gmra.mrb[0].mxu0 %v459
        %v565 = vpop.f32.mrb[0].mxu0
        %v566 = vadd.f32 %v481, %v565
        %v567 = vpop.f32.mrb[0].mxu0
        %v568 = vpop.f32.mrb[0].mxu0
        %v569 = vpop.f32.mrb[0].mxu0
        %570 = vdwg.mxu0
        %v571 = vlaneseq
        %v572 = vand.u32 %v571, 127
        %vm573 = vcmp.lt.s32.totalorder %v572, 18
        %v574 = vsel %vm573, %v566, -inf
        %575 = vmax.xlane.f32.xlu0 %v574
        %v576 = vpop.xlane.xlu0 %575
        %v577 = vsub.f32 %v574, %v576
        %v578 = vmul.f32 %v577, 1.442695
        %v579 = vpow.pop %v578
        %580 = vadd.xlane.f32.xlu0 %v579
        %v581 = vpop.xlane.xlu0 %580
        %v582 = vlog2.pop %v581
        %v583 = vmul.f32 %v582, 0.6931472
        %v584 = vsub.f32 %v577, %v583
        %585 = vst [vmem:[%s266] sm:$0xff] %v584
        %586 = vst [vmem:[#allocation4] sm:$0xff] %v458
        %s587 = sand.u32 %s162, 1
        %s588 = scalar_lea.sflag [#allocation3], %s587
        %s589 = sand.u32 %s162, 1
        %s590 = smul.addr %s589, 8
        %s591 = scalar_lea.vmem [#allocation2], %s590
        // Predicated region
        $region49: #{rnn_forward_seq.1} parent=43 // pred_check
          %p592 = pneg %p172
        $region50: #{rnn_forward_seq.1} parent=43 // pred_check_branch
          %594 = sbr.rel (%p592) target = $region52
        $region51: #{rnn_forward_seq.1} parent=43 // pred_region
          %s596 = ssub.s32 128, 128
          %597 = vsyncadd %s588, %s596
          %s598 = smul.addr %s23, 128
          %s599 = scalar_lea.hbm %s6, %s598
          %s601 = sshll.u32 %s591, 4
          %s602 = int_to_ptr.vmem [resolvable:$true] %s601
          %604 = dma.vmem_to_hbm [thread:$0]  %s602, 128, %s599, %s588
        $region52: #{rnn_forward_seq.1} parent=43 // pred_fallthru
          _
        // Predicated region
        $region53: #{rnn_forward_seq.1} parent=43 // pred_check
          %p605 = pneg %p193
        $region54: #{rnn_forward_seq.1} parent=43 // pred_check_branch
          %607 = sbr.rel (%p605) target = $region56
        $region55: #{rnn_forward_seq.1} parent=43 // pred_region
          %s609 = ssub.s32 128, 128
          %610 = vsyncadd [#allocation5], %s609
          %s612 = sshll.u32 [#allocation4], 4
          %s613 = int_to_ptr.vmem [resolvable:$true] %s612
          %615 = dma.vmem_to_hbm [thread:$0]  %s613, 128, %s7, [#allocation5]
        $region56: #{rnn_forward_seq.1} parent=43 // pred_fallthru
          _
        // Predicated region
        $region57: #{rnn_forward_seq.1} parent=43 // pred_check
          %p616 = pneg %p193
        $region58: #{rnn_forward_seq.1} parent=43 // pred_check_branch
          %618 = sbr.rel (%p616) target = $region60
        $region59: #{rnn_forward_seq.1} parent=43 // pred_region
          %619 = dma.done [#allocation5], 128
        $region60: #{rnn_forward_seq.1} parent=43 // pred_fallthru
          _
      $region44: #{rnn_forward_seq.1} parent=5 // pred_fallthru
        _
      %p620 = scmp.le.s32.totalorder 2, %s18
      // Predicated region
      $region61: #{rnn_forward_seq.1} parent=5 // pred_check
        %p621 = pneg %p620
      $region62: #{rnn_forward_seq.1} parent=5 // pred_check_branch
        %623 = sbr.rel (%p621) target = $region64
      $region63: #{rnn_forward_seq.1} parent=5 // pred_region
        %s624 = ssub.s32 %s18, 2
        // Predicated region
        $region65: #{rnn_forward_seq.1} parent=63 // pred_check
          %p625 = pneg %p178
        $region66: #{rnn_forward_seq.1} parent=63 // pred_check_branch
          %627 = sbr.rel (%p625) target = $region68
        $region67: #{rnn_forward_seq.1} parent=63 // pred_region
          %s628 = sand.u32 %s163, 1
          %s629 = scalar_lea.sflag [#allocation3], %s628
          %s630 = sand.u32 %s163, 1
          %s631 = smul.addr %s630, 8
          %s632 = scalar_lea.vmem [#allocation2], %s631
          %633 = dma.done %s629, 128
        $region68: #{rnn_forward_seq.1} parent=63 // pred_fallthru
          _
      $region64: #{rnn_forward_seq.1} parent=5 // pred_fallthru
        _
    $region6: #{rnn_forward_seq.1} parent=1 // loop_footer
      %s22 = sadd.s32 1, %s18
    $region7: #{rnn_forward_seq.1} parent=1 // loop_footer_branch
      %17 = sbr.rel target = $region3
    $region8: #{rnn_forward_seq.1} parent=1 // loop_exit
      _
    %634 = vsyncpa [#allocation3], 1
    %s635 = scalar_lea.sflag [#allocation3], 1
    %636 = vsyncpa %s635, 1
    %637 = vsyncpa [#allocation5], 1

</llo_original>
